<compile_context>
chip_gen: v6e
topology: v6e:2x2x1
jax: 0.10.0
libtpu: 0.0.40
codegen_flags: <defaults>
</compile_context>

<pallas_src>
import jax
import jax.numpy as jnp
from jax.experimental import pallas as pl
from jax.experimental.pallas import tpu as pltpu  # noqa: F401  (TPU backend)

EPS = 1e-5
LANE = 128


def _round_up(n, m=LANE):
    return ((n + m - 1) // m) * m


def _make_kernel(d0, d1p, d2p):
    """Kernel closure over static layout constants."""

    gb_base = d0 + d1p  # first gamma/beta row in the packed params buffer

    def kernel(x_ref, p_ref, o_ref):
        x = x_ref[...]                                  # (B, d0), f32
        inv_b = jnp.float32(1.0 / x.shape[0])

        # ---- Linear 1 (bias cancelled exactly by training-mode BN mean) ----
        w1t = p_ref[0:d0, 0:d1p]                        # (d0, d1p)
        h = jnp.dot(x, w1t, preferred_element_type=jnp.float32)

        # ---- BatchNorm1d (batch mean, biased var; single pass, clamped) ----
        mean1 = jnp.sum(h, axis=0, keepdims=True) * inv_b
        msq1 = jnp.sum(h * h, axis=0, keepdims=True) * inv_b
        var1 = jnp.maximum(msq1 - mean1 * mean1, 0.0)
        scale1 = p_ref[gb_base + 0:gb_base + 1, 0:d1p] * jax.lax.rsqrt(var1 + EPS)
        shift1 = p_ref[gb_base + 1:gb_base + 2, 0:d1p] - mean1 * scale1
        # ---- fused normalize + affine + ReLU ----
        h = jnp.maximum(h * scale1 + shift1, 0.0)

        # ---- Linear 2 ----
        w2t = p_ref[d0:d0 + d1p, 0:d2p]                 # (d1p, d2p)
        h2 = jnp.dot(h, w2t, preferred_element_type=jnp.float32)

        # ---- BatchNorm1d + ReLU ----
        mean2 = jnp.sum(h2, axis=0, keepdims=True) * inv_b
        msq2 = jnp.sum(h2 * h2, axis=0, keepdims=True) * inv_b
        var2 = jnp.maximum(msq2 - mean2 * mean2, 0.0)
        scale2 = p_ref[gb_base + 2:gb_base + 3, 0:d2p] * jax.lax.rsqrt(var2 + EPS)
        shift2 = p_ref[gb_base + 3:gb_base + 4, 0:d2p] - mean2 * scale2
        o_ref[...] = jnp.maximum(h2 * scale2 + shift2, 0.0)

    return kernel


def _pack_params(params, d0, d1, d2, d1p, d2p):
    """One-time packing of W1^T, W2^T, gamma/beta into a single f32 buffer.

    Padded columns/rows are zero BY CONSTRUCTION, which is what keeps the padded
    output lanes exactly 0 through BN and ReLU.
    """
    dmax = max(d1p, d2p)
    rows = d0 + d1p + 8                                  # 8-row aligned gb block
    buf = jnp.zeros((rows, dmax), jnp.float32)
    buf = buf.at[0:d0, 0:d1].set(params["W1"].T.astype(jnp.float32))
    buf = buf.at[d0:d0 + d1, 0:d2].set(params["W2"].T.astype(jnp.float32))
    gb = d0 + d1p
    buf = buf.at[gb + 0, 0:d1].set(params["g1"].astype(jnp.float32))
    buf = buf.at[gb + 1, 0:d1].set(params["beta1"].astype(jnp.float32))
    buf = buf.at[gb + 2, 0:d2].set(params["g2"].astype(jnp.float32))
    buf = buf.at[gb + 3, 0:d2].set(params["beta2"].astype(jnp.float32))
    return buf


def make_feature_extractor(params, d0):
    """Returns a jit'd forward(x) with all parameter prep done once, up front."""
    d1 = params["W1"].shape[0]
    d2 = params["W2"].shape[0]
    d1p, d2p = _round_up(d1), _round_up(d2)

    pbuf = _pack_params(params, d0, d1, d2, d1p, d2p)
    kernel = _make_kernel(d0, d1p, d2p)

    def forward(x):
        B = x.shape[0]
        full = lambda shape: pl.BlockSpec(shape, lambda: (0,) * len(shape))
        out_pad = pl.pallas_call(
            kernel,
            out_shape=jax.ShapeDtypeStruct((B, d2p), jnp.float32),
            in_specs=[full((B, d0)), full(pbuf.shape)],
            out_specs=full((B, d2p)),
        )(x.astype(jnp.float32), pbuf)
        return out_pad[:, :d2]

    return jax.jit(forward)


def _reference(x, params):
    """Pure-JAX reference matching the PyTorch forward (training-mode BN, ReLU)."""
    h = x @ params["W1"].T + params["b1"]
    m = h.mean(0, keepdims=True)
    v = ((h - m) ** 2).mean(0, keepdims=True)
    h = (h - m) / jnp.sqrt(v + EPS) * params["g1"] + params["beta1"]
    h = jnp.maximum(h, 0.0)
    h = h @ params["W2"].T + params["b2"]
    m = h.mean(0, keepdims=True)
    v = ((h - m) ** 2).mean(0, keepdims=True)
    h = (h - m) / jnp.sqrt(v + EPS) * params["g2"] + params["beta2"]
    return jnp.maximum(h, 0.0)


if __name__ == "__main__":
    # Small shapes consistent with the module: dims = [16, 32, 8], batch = 8.
    B, d0, d1, d2 = 8, 16, 32, 8

    key = jax.random.PRNGKey(0)
    kx, kw1, kb1, kw2, kb2 = jax.random.split(key, 5)

    x = jax.random.normal(kx, (B, d0), dtype=jnp.float32)

    params = {
        "W1": jax.random.uniform(kw1, (d1, d0), jnp.float32, -0.25, 0.25),
        "b1": jax.random.uniform(kb1, (d1,), jnp.float32, -0.25, 0.25),
        "g1": jnp.ones((d1,), jnp.float32),
        "beta1": jnp.zeros((d1,), jnp.float32),
        "W2": jax.random.uniform(kw2, (d2, d1), jnp.float32, -0.2, 0.2),
        "b2": jax.random.uniform(kb2, (d2,), jnp.float32, -0.2, 0.2),
        "g2": jnp.ones((d2,), jnp.float32),
        "beta2": jnp.zeros((d2,), jnp.float32),
    }

    # b1/b2 are intentionally not packed: training-mode BN mean subtraction
    # removes any per-column constant exactly (reference includes them).
    forward = make_feature_extractor(params, d0)

    out = forward(x)
    out = jax.block_until_ready(out)

    ref = _reference(x, params)
    assert out.shape == (B, d2)
    assert jnp.allclose(out, ref, atol=1e-4, rtol=1e-4), "mismatch vs reference"

    print("KERNEL_OK")
</pallas_src>

<mosaic_0001>
module attributes {stable_mosaic.version = 11 : i64} {
  func.func @kernel(%arg0: memref<8x16xf32, #tpu.memory_space<vmem>>, %arg1: memref<152x128xf32, #tpu.memory_space<vmem>>, %arg2: memref<8x128xf32, #tpu.memory_space<vmem>>) attributes {dimension_semantics = [], scalar_prefetch = 0 : i64, scratch_operands = 0 : i64, tpu.core_type = #tpu.core_type<tc>} {
    %c0 = arith.constant 0 : index
    %c0_0 = arith.constant 0 : index
    %0 = vector.load %arg0[%c0, %c0_0] : memref<8x16xf32, #tpu.memory_space<vmem>>, vector<8x16xf32>
    %c0_1 = arith.constant 0 : index
    %c0_2 = arith.constant 0 : index
    %1 = vector.load %arg1[%c0_1, %c0_2] : memref<152x128xf32, #tpu.memory_space<vmem>>, vector<16x128xf32>
    %cst = arith.constant dense<0.000000e+00> : vector<8x128xf32>
    %2 = tpu.matmul %0, %1, %cst {dimension_numbers = #tpu.dot_dimension_numbers<[1], [0], [0], [1], [0, 0, 1, 1], [], []>} : vector<8x16xf32>, vector<16x128xf32>, vector<8x128xf32> -> vector<8x128xf32>
    %cst_3 = arith.constant dense<0.000000e+00> : vector<128xf32>
    %3 = vector.multi_reduction <add>, %2, %cst_3 [0] : vector<8x128xf32> to vector<128xf32>
    %4 = vector.shape_cast %3 : vector<128xf32> to vector<1x128xf32>
    %cst_4 = arith.constant 1.250000e-01 : f32
    %5 = vector.broadcast %cst_4 : f32 to vector<1x128xf32>
    %6 = arith.mulf %4, %5 : vector<1x128xf32>
    %7 = arith.mulf %2, %2 : vector<8x128xf32>
    %cst_5 = arith.constant dense<0.000000e+00> : vector<128xf32>
    %8 = vector.multi_reduction <add>, %7, %cst_5 [0] : vector<8x128xf32> to vector<128xf32>
    %9 = vector.shape_cast %8 : vector<128xf32> to vector<1x128xf32>
    %cst_6 = arith.constant 1.250000e-01 : f32
    %10 = vector.broadcast %cst_6 : f32 to vector<1x128xf32>
    %11 = arith.mulf %9, %10 : vector<1x128xf32>
    %12 = arith.mulf %6, %6 : vector<1x128xf32>
    %13 = arith.subf %11, %12 : vector<1x128xf32>
    %cst_7 = arith.constant 0.000000e+00 : f32
    %14 = vector.broadcast %cst_7 : f32 to vector<1x128xf32>
    %15 = arith.maximumf %13, %14 : vector<1x128xf32>
    %c144 = arith.constant 144 : index
    %c0_8 = arith.constant 0 : index
    %16 = vector.load %arg1[%c144, %c0_8] : memref<152x128xf32, #tpu.memory_space<vmem>>, vector<1x128xf32>
    %cst_9 = arith.constant 9.99999974E-6 : f32
    %17 = vector.broadcast %cst_9 : f32 to vector<1x128xf32>
    %18 = arith.addf %15, %17 : vector<1x128xf32>
    %19 = math.rsqrt %18 : vector<1x128xf32>
    %20 = arith.mulf %16, %19 : vector<1x128xf32>
    %c145 = arith.constant 145 : index
    %c0_10 = arith.constant 0 : index
    %21 = vector.load %arg1[%c145, %c0_10] : memref<152x128xf32, #tpu.memory_space<vmem>>, vector<1x128xf32>
    %22 = arith.mulf %6, %20 : vector<1x128xf32>
    %23 = arith.subf %21, %22 : vector<1x128xf32>
    %24 = vector.broadcast %20 : vector<1x128xf32> to vector<8x128xf32>
    %25 = arith.mulf %2, %24 : vector<8x128xf32>
    %26 = vector.broadcast %23 : vector<1x128xf32> to vector<8x128xf32>
    %27 = arith.addf %25, %26 : vector<8x128xf32>
    %cst_11 = arith.constant 0.000000e+00 : f32
    %28 = vector.broadcast %cst_11 : f32 to vector<8x128xf32>
    %29 = arith.maximumf %27, %28 : vector<8x128xf32>
    %c16 = arith.constant 16 : index
    %c0_12 = arith.constant 0 : index
    %30 = vector.load %arg1[%c16, %c0_12] : memref<152x128xf32, #tpu.memory_space<vmem>>, vector<128x128xf32>
    %cst_13 = arith.constant dense<0.000000e+00> : vector<8x128xf32>
    %31 = tpu.matmul %29, %30, %cst_13 {dimension_numbers = #tpu.dot_dimension_numbers<[1], [0], [0], [1], [0, 0, 1, 1], [], []>} : vector<8x128xf32>, vector<128x128xf32>, vector<8x128xf32> -> vector<8x128xf32>
    %cst_14 = arith.constant dense<0.000000e+00> : vector<128xf32>
    %32 = vector.multi_reduction <add>, %31, %cst_14 [0] : vector<8x128xf32> to vector<128xf32>
    %33 = vector.shape_cast %32 : vector<128xf32> to vector<1x128xf32>
    %cst_15 = arith.constant 1.250000e-01 : f32
    %34 = vector.broadcast %cst_15 : f32 to vector<1x128xf32>
    %35 = arith.mulf %33, %34 : vector<1x128xf32>
    %36 = arith.mulf %31, %31 : vector<8x128xf32>
    %cst_16 = arith.constant dense<0.000000e+00> : vector<128xf32>
    %37 = vector.multi_reduction <add>, %36, %cst_16 [0] : vector<8x128xf32> to vector<128xf32>
    %38 = vector.shape_cast %37 : vector<128xf32> to vector<1x128xf32>
    %cst_17 = arith.constant 1.250000e-01 : f32
    %39 = vector.broadcast %cst_17 : f32 to vector<1x128xf32>
    %40 = arith.mulf %38, %39 : vector<1x128xf32>
    %41 = arith.mulf %35, %35 : vector<1x128xf32>
    %42 = arith.subf %40, %41 : vector<1x128xf32>
    %cst_18 = arith.constant 0.000000e+00 : f32
    %43 = vector.broadcast %cst_18 : f32 to vector<1x128xf32>
    %44 = arith.maximumf %42, %43 : vector<1x128xf32>
    %c146 = arith.constant 146 : index
    %c0_19 = arith.constant 0 : index
    %45 = vector.load %arg1[%c146, %c0_19] : memref<152x128xf32, #tpu.memory_space<vmem>>, vector<1x128xf32>
    %cst_20 = arith.constant 9.99999974E-6 : f32
    %46 = vector.broadcast %cst_20 : f32 to vector<1x128xf32>
    %47 = arith.addf %44, %46 : vector<1x128xf32>
    %48 = math.rsqrt %47 : vector<1x128xf32>
    %49 = arith.mulf %45, %48 : vector<1x128xf32>
    %c147 = arith.constant 147 : index
    %c0_21 = arith.constant 0 : index
    %50 = vector.load %arg1[%c147, %c0_21] : memref<152x128xf32, #tpu.memory_space<vmem>>, vector<1x128xf32>
    %51 = arith.mulf %35, %49 : vector<1x128xf32>
    %52 = arith.subf %50, %51 : vector<1x128xf32>
    %53 = vector.broadcast %49 : vector<1x128xf32> to vector<8x128xf32>
    %54 = arith.mulf %31, %53 : vector<8x128xf32>
    %55 = vector.broadcast %52 : vector<1x128xf32> to vector<8x128xf32>
    %56 = arith.addf %54, %55 : vector<8x128xf32>
    %cst_22 = arith.constant 0.000000e+00 : f32
    %57 = vector.broadcast %cst_22 : f32 to vector<8x128xf32>
    %58 = arith.maximumf %56, %57 : vector<8x128xf32>
    %c0_23 = arith.constant 0 : index
    %c0_24 = arith.constant 0 : index
    %59 = vector.load %arg2[%c0_23, %c0_24] : memref<8x128xf32, #tpu.memory_space<vmem>>, vector<8x128xf32>
    tpu.vector_store %arg2[%c0_23, %c0_24], %58 {strides = array<i32>} : memref<8x128xf32, #tpu.memory_space<vmem>>, vector<8x128xf32>,
    return
  }
}

</mosaic_0001>

<llo_original>
// kernel: forward.1
$region0: #{forward.1}
  #allocation0 [shape = 'u32[]', space=smem, size = 0x4, offset = 0x4, fixed_abs, tag = 'smem constant byte address 0x4 - core index']
  #allocation1 [shape = 'u32[144,128]{1,0:T(1,128)}', space=vmem, size = 0x12000, scoped, tag = 'internal scratch']
  %s0 = inlined_call_operand.hbm [shape: f32[8,16], index: 0, kind: input, shape index: {}]
  %s1 = inlined_call_operand.hbm [shape: f32[152,128], index: 1, kind: input, shape index: {}]
  %s2 = inlined_call_operand.hbm [shape: f32[8,128], index: 2, kind: output, shape index: {}]
  %s3 = sld [smem:[#allocation0]]
  $region26: #{forward.1} parent=0
    _
  %s5 = ssub.s32 1, %s3
  %s6 = scalar_select 0, %s5, %s3
  $region1: #{forward.1} parent=0
    #allocation2 [shape = 'u8[4096]{0}', space=vmem, size = 0x1000, scoped, tag = 'input window, operand 0, single buffered']
    #allocation3 [shape = 's32[1]{0}', space=sflag, size = 0x4, scoped, tag = 'scoped memory for forward.1']
    #allocation4 [shape = 's32[1]{0}', space=sflag, size = 0x4, scoped, tag = 'scoped memory for forward.1']
    #allocation5 [shape = 'u8[77824]{0}', space=vmem, size = 0x13000, scoped, tag = 'input window, operand 1, single buffered']
    #allocation6 [shape = 's32[1]{0}', space=sflag, size = 0x4, scoped, tag = 'scoped memory for forward.1']
    #allocation7 [shape = 'u8[4096]{0}', space=vmem, size = 0x1000, scoped, tag = 'output window, operand 0, single buffered']
    %7 = vsyncpa [#allocation3], 0
    %8 = vsyncpa [#allocation6], 0
    %9 = vsyncpa [#allocation4], 0
    // Predicated region
    $region2: #{forward.1} parent=1 // pred_check
      _
    $region3: #{forward.1} parent=1 // pred_check_branch
      %11 = sbr.rel (0) target = $region5
    $region4: #{forward.1} parent=1 // pred_region
      %s13 = ssub.s32 128, 128
      %14 = vsyncadd [#allocation3], %s13
      %s16 = sshll.u32 [#allocation2], 4
      %s17 = int_to_ptr.vmem [resolvable:$true] %s16
      %19 = dma.hbm_to_vmem [thread:$0]  %s0, 128, %s17, [#allocation3]
    $region5: #{forward.1} parent=1 // pred_fallthru
      _
    // Predicated region
    $region6: #{forward.1} parent=1 // pred_check
      _
    $region7: #{forward.1} parent=1 // pred_check_branch
      %21 = sbr.rel (0) target = $region9
    $region8: #{forward.1} parent=1 // pred_region
      %s23 = ssub.s32 2432, 2432
      %24 = vsyncadd [#allocation6], %s23
      %s25 = sshll.u32 [#allocation5], 4
      %s26 = int_to_ptr.vmem [resolvable:$true] %s25
      %31 = dma.hbm_to_vmem [thread:$0]  %s1, 2432, %s26, [#allocation6], 128, 128, 8
    $region9: #{forward.1} parent=1 // pred_fallthru
      _
    // Predicated region
    $region10: #{forward.1} parent=1 // pred_check
      _
    $region11: #{forward.1} parent=1 // pred_check_branch
      %33 = sbr.rel (0) target = $region13
    $region12: #{forward.1} parent=1 // pred_region
      %34 = dma.done [#allocation3], 128
    $region13: #{forward.1} parent=1 // pred_fallthru
      _
    // Predicated region
    $region14: #{forward.1} parent=1 // pred_check
      _
    $region15: #{forward.1} parent=1 // pred_check_branch
      %36 = sbr.rel (0) target = $region17
    $region16: #{forward.1} parent=1 // pred_region
      %37 = dma.done [#allocation6], 2432
    $region17: #{forward.1} parent=1 // pred_fallthru
      _
    %v38 = vld [vmem:[#allocation2] sm:$0xff]
    %v39 = vld [vmem:[#allocation5] sm:$0xff]
    %v40 = vld [vmem:[#allocation5 + $0x8] sm:$0xff]
    %vm41 = vcmask 130048
    %v43 = vsel %vm41, %v38, 0
    %45 = vmatprep.subr.mxu0 0.0
    %46 = vmatpush1.msra.mxu0 0.0
    %47 = vmatprep.subr.mxu0 0.0
    %48 = vmatpush1.msra.mxu0 0.0
    %49 = vmatprep.subr.mxu0 0.0
    %50 = vmatpush1.msra.mxu0 0.0
    %51 = vmatprep.subr.mxu0 0.0
    %52 = vmatpush1.msra.mxu0 0.0
    %53 = vmatprep.subr.mxu0 0.0
    %54 = vmatpush1.msra.mxu0 0.0
    %55 = vmatprep.subr.mxu0 0.0
    %56 = vmatpush1.msra.mxu0 0.0
    %57 = vmatprep.subr.mxu0 0.0
    %58 = vmatpush1.msra.mxu0 0.0
    %59 = vmatprep.subr.mxu0 0.0
    %60 = vmatpush1.msra.mxu0 0.0
    %61 = vmatprep.subr.mxu0 0.0
    %62 = vmatpush1.msra.mxu0 0.0
    %63 = vmatprep.subr.mxu0 0.0
    %64 = vmatpush1.msra.mxu0 0.0
    %65 = vmatprep.subr.mxu0 0.0
    %66 = vmatpush1.msra.mxu0 0.0
    %67 = vmatprep.subr.mxu0 0.0
    %68 = vmatpush1.msra.mxu0 0.0
    %69 = vmatprep.subr.mxu0 0.0
    %70 = vmatpush1.msra.mxu0 0.0
    %71 = vmatprep.subr.mxu0 0.0
    %72 = vmatpush1.msra.mxu0 0.0
    %73 = vmatprep.subr.mxu0 0.0
    %74 = vmatpush1.msra.mxu0 %v40
    %75 = vmatprep.subr.mxu0 0.0
    %76 = vmatpush1.msra.mxu0 %v39
    %77 = vmatprep.subr.mxu0 0.0
    %78 = vmatpush2.msra.mxu0 0.0
    %79 = vmatprep.subr.mxu0 0.0
    %80 = vmatpush2.msra.mxu0 0.0
    %81 = vmatprep.subr.mxu0 0.0
    %82 = vmatpush2.msra.mxu0 0.0
    %83 = vmatprep.subr.mxu0 0.0
    %84 = vmatpush2.msra.mxu0 0.0
    %85 = vmatprep.subr.mxu0 0.0
    %86 = vmatpush2.msra.mxu0 0.0
    %87 = vmatprep.subr.mxu0 0.0
    %88 = vmatpush2.msra.mxu0 0.0
    %89 = vmatprep.subr.mxu0 0.0
    %90 = vmatpush2.msra.mxu0 0.0
    %91 = vmatprep.subr.mxu0 0.0
    %92 = vmatpush2.msra.mxu0 0.0
    %93 = vmatprep.subr.mxu0 0.0
    %94 = vmatpush2.msra.mxu0 0.0
    %95 = vmatprep.subr.mxu0 0.0
    %96 = vmatpush2.msra.mxu0 0.0
    %97 = vmatprep.subr.mxu0 0.0
    %98 = vmatpush2.msra.mxu0 0.0
    %99 = vmatprep.subr.mxu0 0.0
    %100 = vmatpush2.msra.mxu0 0.0
    %101 = vmatprep.subr.mxu0 0.0
    %102 = vmatpush2.msra.mxu0 0.0
    %103 = vmatprep.subr.mxu0 0.0
    %104 = vmatpush2.msra.mxu0 0.0
    %105 = vmatprep.subr.mxu0 0.0
    %106 = vmatpush2.msra.mxu0 0.0
    %107 = vmatprep.subr.mxu0 0.0
    %108 = vmatpush2.msra.mxu0 0.0
    %109 = vmatprep.mubr.f32.mxu0 0.0
    %110 = vmatmul.mubr.f32.gmra.mxu0 %v43
    %v111 = vpop.f32.mrf.mxu0
    %v112 = vadd.f32 0.0, %v111
    %v113 = vpop.f32.mrf.mxu0
    %114 = vdwg.mxu0
    %v115 = vrot.slane %v112, 4
    %v116 = vadd.f32 %v112, %v115
    %v117 = vrot.slane %v116, 2
    %v118 = vadd.f32 %v116, %v117
    %v119 = vrot.slane %v118, 1
    %v120 = vadd.f32 %v118, %v119
    %v121 = vmul.f32 %v120, 0.125
    %v122 = vmul.f32 %v112, %v112
    %v123 = vrot.slane %v122, 4
    %v124 = vadd.f32 %v122, %v123
    %v125 = vrot.slane %v124, 2
    %v126 = vadd.f32 %v124, %v125
    %v127 = vrot.slane %v126, 1
    %v128 = vadd.f32 %v126, %v127
    %v129 = vmul.f32 %v128, 0.125
    %v130 = vmul.f32 %v121, %v121
    %v131 = vsub.f32 %v129, %v130
    %v132 = vmax.f32 %v131, 0.0
    %v133 = vld [vmem:[#allocation5 + $0x90] sm:$0x1]
    %v134 = vadd.f32 %v132, 1e-05
    %v135 = vrsqrt.pop %v134
    %v136 = vmul.f32 %v133, %v135
    %v137 = vld [vmem:[#allocation5 + $0x91] sm:$0x1]
    %v138 = vmul.f32 %v121, %v136
    %v139 = vsub.f32 %v137, %v138
    %v140 = vlaneseq
    %v141 = vshrl.u32 %v140, 7
    %v142 = vsub.s32 0, %v141
    %v143 = vrot.slane %v136, %v142
    %v144 = vmul.f32 %v112, %v143
    %v145 = vlaneseq
    %v146 = vshrl.u32 %v145, 7
    %v147 = vsub.s32 0, %v146
    %v148 = vrot.slane %v139, %v147
    %v149 = vadd.f32 %v144, %v148
    %v150 = vmax.f32 %v149, 0.0
    %v151 = vld [vmem:[#allocation5 + $0x10] sm:$0xff]
    %v152 = vld [vmem:[#allocation5 + $0x18] sm:$0xff]
    %v153 = vld [vmem:[#allocation5 + $0x20] sm:$0xff]
    %v154 = vld [vmem:[#allocation5 + $0x28] sm:$0xff]
    %v155 = vld [vmem:[#allocation5 + $0x30] sm:$0xff]
    %v156 = vld [vmem:[#allocation5 + $0x38] sm:$0xff]
    %v157 = vld [vmem:[#allocation5 + $0x40] sm:$0xff]
    %v158 = vld [vmem:[#allocation5 + $0x48] sm:$0xff]
    %v159 = vld [vmem:[#allocation5 + $0x50] sm:$0xff]
    %v160 = vld [vmem:[#allocation5 + $0x58] sm:$0xff]
    %v161 = vld [vmem:[#allocation5 + $0x60] sm:$0xff]
    %v162 = vld [vmem:[#allocation5 + $0x68] sm:$0xff]
    %v163 = vld [vmem:[#allocation5 + $0x70] sm:$0xff]
    %v164 = vld [vmem:[#allocation5 + $0x78] sm:$0xff]
    %v165 = vld [vmem:[#allocation5 + $0x80] sm:$0xff]
    %v166 = vld [vmem:[#allocation5 + $0x88] sm:$0xff]
    %167 = vmatprep.subr.mxu0 0.0
    %168 = vmatpush1.msra.mxu0 %v166
    %169 = vmatprep.subr.mxu0 0.0
    %170 = vmatpush1.msra.mxu0 %v165
    %171 = vmatprep.subr.mxu0 0.0
    %172 = vmatpush1.msra.mxu0 %v164
    %173 = vmatprep.subr.mxu0 0.0
    %174 = vmatpush1.msra.mxu0 %v163
    %175 = vmatprep.subr.mxu0 0.0
    %176 = vmatpush1.msra.mxu0 %v162
    %177 = vmatprep.subr.mxu0 0.0
    %178 = vmatpush1.msra.mxu0 %v161
    %179 = vmatprep.subr.mxu0 0.0
    %180 = vmatpush1.msra.mxu0 %v160
    %181 = vmatprep.subr.mxu0 0.0
    %182 = vmatpush1.msra.mxu0 %v159
    %183 = vmatprep.subr.mxu0 0.0
    %184 = vmatpush1.msra.mxu0 %v158
    %185 = vmatprep.subr.mxu0 0.0
    %186 = vmatpush1.msra.mxu0 %v157
    %187 = vmatprep.subr.mxu0 0.0
    %188 = vmatpush1.msra.mxu0 %v156
    %189 = vmatprep.subr.mxu0 0.0
    %190 = vmatpush1.msra.mxu0 %v155
    %191 = vmatprep.subr.mxu0 0.0
    %192 = vmatpush1.msra.mxu0 %v154
    %193 = vmatprep.subr.mxu0 0.0
    %194 = vmatpush1.msra.mxu0 %v153
    %195 = vmatprep.subr.mxu0 0.0
    %196 = vmatpush1.msra.mxu0 %v152
    %197 = vmatprep.subr.mxu0 0.0
    %198 = vmatpush1.msra.mxu0 %v151
    %199 = vmatprep.subr.mxu0 0.0
    %200 = vmatpush2.msra.mxu0 0.0
    %201 = vmatprep.subr.mxu0 0.0
    %202 = vmatpush2.msra.mxu0 0.0
    %203 = vmatprep.subr.mxu0 0.0
    %204 = vmatpush2.msra.mxu0 0.0
    %205 = vmatprep.subr.mxu0 0.0
    %206 = vmatpush2.msra.mxu0 0.0
    %207 = vmatprep.subr.mxu0 0.0
    %208 = vmatpush2.msra.mxu0 0.0
    %209 = vmatprep.subr.mxu0 0.0
    %210 = vmatpush2.msra.mxu0 0.0
    %211 = vmatprep.subr.mxu0 0.0
    %212 = vmatpush2.msra.mxu0 0.0
    %213 = vmatprep.subr.mxu0 0.0
    %214 = vmatpush2.msra.mxu0 0.0
    %215 = vmatprep.subr.mxu0 0.0
    %216 = vmatpush2.msra.mxu0 0.0
    %217 = vmatprep.subr.mxu0 0.0
    %218 = vmatpush2.msra.mxu0 0.0
    %219 = vmatprep.subr.mxu0 0.0
    %220 = vmatpush2.msra.mxu0 0.0
    %221 = vmatprep.subr.mxu0 0.0
    %222 = vmatpush2.msra.mxu0 0.0
    %223 = vmatprep.subr.mxu0 0.0
    %224 = vmatpush2.msra.mxu0 0.0
    %225 = vmatprep.subr.mxu0 0.0
    %226 = vmatpush2.msra.mxu0 0.0
    %227 = vmatprep.subr.mxu0 0.0
    %228 = vmatpush2.msra.mxu0 0.0
    %229 = vmatprep.subr.mxu0 0.0
    %230 = vmatpush2.msra.mxu0 0.0
    %231 = vmatprep.mubr.f32.mxu0 0.0
    %232 = vmatmul.mubr.f32.gmra.mxu0 %v150
    %v233 = vpop.f32.mrf.mxu0
    %v234 = vadd.f32 0.0, %v233
    %v235 = vpop.f32.mrf.mxu0
    %236 = vdwg.mxu0
    %v237 = vrot.slane %v234, 4
    %v238 = vadd.f32 %v234, %v237
    %v239 = vrot.slane %v238, 2
    %v240 = vadd.f32 %v238, %v239
    %v241 = vrot.slane %v240, 1
    %v242 = vadd.f32 %v240, %v241
    %v243 = vmul.f32 %v242, 0.125
    %v244 = vmul.f32 %v234, %v234
    %v245 = vrot.slane %v244, 4
    %v246 = vadd.f32 %v244, %v245
    %v247 = vrot.slane %v246, 2
    %v248 = vadd.f32 %v246, %v247
    %v249 = vrot.slane %v248, 1
    %v250 = vadd.f32 %v248, %v249
    %v251 = vmul.f32 %v250, 0.125
    %v252 = vmul.f32 %v243, %v243
    %v253 = vsub.f32 %v251, %v252
    %v254 = vmax.f32 %v253, 0.0
    %v255 = vld [vmem:[#allocation5 + $0x92] sm:$0x1]
    %v256 = vadd.f32 %v254, 1e-05
    %v257 = vrsqrt.pop %v256
    %v258 = vmul.f32 %v255, %v257
    %v259 = vld [vmem:[#allocation5 + $0x93] sm:$0x1]
    %v260 = vmul.f32 %v243, %v258
    %v261 = vsub.f32 %v259, %v260
    %v262 = vlaneseq
    %v263 = vshrl.u32 %v262, 7
    %v264 = vsub.s32 0, %v263
    %v265 = vrot.slane %v258, %v264
    %v266 = vmul.f32 %v234, %v265
    %v267 = vlaneseq
    %v268 = vshrl.u32 %v267, 7
    %v269 = vsub.s32 0, %v268
    %v270 = vrot.slane %v261, %v269
    %v271 = vadd.f32 %v266, %v270
    %v272 = vmax.f32 %v271, 0.0
    %273 = vst [vmem:[#allocation7] sm:$0xff] %v272
    // Predicated region
    $region18: #{forward.1} parent=1 // pred_check
      _
    $region19: #{forward.1} parent=1 // pred_check_branch
      %275 = sbr.rel (0) target = $region21
    $region20: #{forward.1} parent=1 // pred_region
      %s277 = ssub.s32 128, 128
      %278 = vsyncadd [#allocation4], %s277
      %s280 = sshll.u32 [#allocation7], 4
      %s281 = int_to_ptr.vmem [resolvable:$true] %s280
      %283 = dma.vmem_to_hbm [thread:$0]  %s281, 128, %s2, [#allocation4]
    $region21: #{forward.1} parent=1 // pred_fallthru
      _
    // Predicated region
    $region22: #{forward.1} parent=1 // pred_check
      _
    $region23: #{forward.1} parent=1 // pred_check_branch
      %285 = sbr.rel (0) target = $region25
    $region24: #{forward.1} parent=1 // pred_region
      %286 = dma.done [#allocation4], 128
    $region25: #{forward.1} parent=1 // pred_fallthru
      _
    %287 = vsyncpa [#allocation3], 1
    %288 = vsyncpa [#allocation6], 1
    %289 = vsyncpa [#allocation4], 1

</llo_original>
